<compile_context>
chip_gen: v6e
topology: v6e:2x2x1
jax: 0.10.0
libtpu: 0.0.40
codegen_flags: <defaults>
</compile_context>

<pallas_src>
import functools

import jax
import jax.numpy as jnp
from jax.experimental import pallas as pl
from jax.experimental.pallas import tpu as pltpu


def _round_up(x, m):
    return ((x + m - 1) // m) * m


def ncf_mlp_kernel(u_ref, m_ref, w1u_ref, w1m_ref, b1_ref, w2t_ref, b2_ref, o_ref):
    # u, m:   (TILE_B, E)  bf16   gathered user / movie embedding rows
    # w1u/m:  (E, 8)       bf16   split halves of Linear(2E, 8) weight
    # b1:     (1, 8)       f32
    # w2t:    (1, 8)       f32    Linear(8, 1) weight, transposed
    # b2:     (1, 1)       f32
    # o:      (1, TILE_B)  f32    lane-dense output slab
    h = jnp.dot(u_ref[...], w1u_ref[...], preferred_element_type=jnp.float32)
    h = h + jnp.dot(m_ref[...], w1m_ref[...], preferred_element_type=jnp.float32)
    h = jnp.maximum(h + b1_ref[...], 0.0)                     # ReLU, (TILE_B, 8) f32

    # Second Linear as a transposed-RHS contraction: (1,8) . (TILE_B,8)^T -> (1, TILE_B).
    # This keeps the batch dimension on the lane axis, so the final store is dense.
    y = jax.lax.dot_general(
        w2t_ref[...], h,
        dimension_numbers=(((1,), (1,)), ((), ())),
        preferred_element_type=jnp.float32,
    )
    y = y + b2_ref[...]                                       # (1, TILE_B)

    # Sigmoid: exp on the EUP, approximate reciprocal also on the EUP.
    y = pl.reciprocal(1.0 + jnp.exp(-y), approx=True)
    o_ref[...] = y * 4.0 + 1.0                                 # rating rescale


@functools.partial(jax.jit, static_argnames=("tile_b",))
def ncf_forward(user_ids, movie_ids, params, *, tile_b=8192):
    """Full NCFModel.forward: gather embeddings (glue), tiled MLP in Pallas."""
    E = params["user_embedding"].shape[1]
    B = user_ids.shape[0]

    # Batch tiling (lane-aligned). TILE_B sized well under v7x's 64 MiB VMEM:
    # two bf16 (TILE_B, E) inputs double-buffered stay in the low-MiB range.
    tile_b = max(128, min(int(tile_b), _round_up(B, 128)))
    b_pad = _round_up(B, tile_b)
    num_tiles = pl.cdiv(b_pad, tile_b)

    uid = jnp.pad(user_ids, (0, b_pad - B))
    mid = jnp.pad(movie_ids, (0, b_pad - B))

    # Gather in JAX, cast to bf16 for the HBM-bound streams; NO concat.
    u = params["user_embedding"][uid].astype(jnp.bfloat16)    # (B_pad, E)
    m = params["movie_embedding"][mid].astype(jnp.bfloat16)   # (B_pad, E)

    w1 = params["w1"]                                          # (2E, 8) f32
    w1u = w1[:E].astype(jnp.bfloat16)                          # (E, 8) bf16
    w1m = w1[E:].astype(jnp.bfloat16)                          # (E, 8) bf16
    b1 = params["b1"]                                          # (1, 8) f32
    w2t = params["w2"].T                                       # (1, 8) f32
    b2 = params["b2"]                                          # (1, 1) f32

    out = pl.pallas_call(
        ncf_mlp_kernel,
        out_shape=jax.ShapeDtypeStruct((1, b_pad), jnp.float32),
        grid=(num_tiles,),
        in_specs=[
            pl.BlockSpec((tile_b, E), lambda i: (i, 0)),       # user rows
            pl.BlockSpec((tile_b, E), lambda i: (i, 0)),       # movie rows
            pl.BlockSpec((E, 8), lambda i: (0, 0)),            # w1 (user half)
            pl.BlockSpec((E, 8), lambda i: (0, 0)),            # w1 (movie half)
            pl.BlockSpec((1, 8), lambda i: (0, 0)),            # b1
            pl.BlockSpec((1, 8), lambda i: (0, 0)),            # w2^T
            pl.BlockSpec((1, 1), lambda i: (0, 0)),            # b2
        ],
        out_specs=pl.BlockSpec((1, tile_b), lambda i: (0, i)),  # lane-dense slab
        compiler_params=pltpu.CompilerParams(
            dimension_semantics=("parallel",),
            vmem_limit_bytes=32 * 1024 * 1024,
        ),
    )(u, m, w1u, w1m, b1, w2t, b2)

    # torch .squeeze() on [B, 1] -> [B]; drop batch padding.
    return out[0, :B]


def ncf_reference(user_ids, movie_ids, params):
    """Pure-JAX f32 reference matching the PyTorch module."""
    u = params["user_embedding"][user_ids]
    m = params["movie_embedding"][movie_ids]
    x = jnp.concatenate([u, m], axis=-1)
    h = jnp.maximum(x @ params["w1"] + params["b1"], 0.0)
    y = jax.nn.sigmoid(h @ params["w2"] + params["b2"])
    return (y * 4.0 + 1.0)[:, 0]


def init_params(key, num_users, num_movies, embed_dim):
    k1, k2, k3, k4, k5, k6 = jax.random.split(key, 6)
    # Embedding default init: N(0, 1)
    user_embedding = jax.random.normal(k1, (num_users, embed_dim), jnp.float32)
    movie_embedding = jax.random.normal(k2, (num_movies, embed_dim), jnp.float32)
    # Linear default init: U(-1/sqrt(fan_in), 1/sqrt(fan_in))
    fan1 = embed_dim * 2
    lim1 = 1.0 / jnp.sqrt(jnp.float32(fan1))
    w1 = jax.random.uniform(k3, (fan1, 8), jnp.float32, -lim1, lim1)
    b1 = jax.random.uniform(k4, (1, 8), jnp.float32, -lim1, lim1)
    lim2 = 1.0 / jnp.sqrt(jnp.float32(8))
    w2 = jax.random.uniform(k5, (8, 1), jnp.float32, -lim2, lim2)
    b2 = jax.random.uniform(k6, (1, 1), jnp.float32, -lim2, lim2)
    return {
        "user_embedding": user_embedding,
        "movie_embedding": movie_embedding,
        "w1": w1,
        "b1": b1,
        "w2": w2,
        "b2": b2,
    }


if __name__ == "__main__":
    num_users, num_movies, embed_dim = 16, 24, 32
    batch = 8

    key = jax.random.PRNGKey(0)
    pkey, ukey, mkey = jax.random.split(key, 3)
    params = init_params(pkey, num_users, num_movies, embed_dim)

    user_ids = jax.random.randint(ukey, (batch,), 0, num_users, dtype=jnp.int32)
    movie_ids = jax.random.randint(mkey, (batch,), 0, num_movies, dtype=jnp.int32)

    out = ncf_forward(user_ids, movie_ids, params)
    out = jax.block_until_ready(out)
    ref = ncf_reference(user_ids, movie_ids, params)

    assert out.shape == (batch,)
    assert bool(jnp.all(jnp.isfinite(out)))
    assert bool(jnp.all((out >= 0.99) & (out <= 5.01)))
    assert bool(jnp.allclose(out, ref, atol=5e-2, rtol=5e-2)), (out, ref)

    # Exercise multi-tile grid + batch padding with a small tile size.
    batch2 = 200
    u2 = jax.random.randint(jax.random.PRNGKey(1), (batch2,), 0, num_users, dtype=jnp.int32)
    m2 = jax.random.randint(jax.random.PRNGKey(2), (batch2,), 0, num_movies, dtype=jnp.int32)
    out2 = jax.block_until_ready(ncf_forward(u2, m2, params, tile_b=128))
    ref2 = ncf_reference(u2, m2, params)
    assert out2.shape == (batch2,)
    assert bool(jnp.allclose(out2, ref2, atol=5e-2, rtol=5e-2))

    print("KERNEL_OK")
</pallas_src>

<mosaic_0001>
module attributes {stable_mosaic.version = 11 : i64} {
  func.func @ncf_mlp_kernel(%arg0: i32, %arg1: memref<128x32xbf16, #tpu.memory_space<vmem>>, %arg2: memref<128x32xbf16, #tpu.memory_space<vmem>>, %arg3: memref<32x8xbf16, #tpu.memory_space<vmem>>, %arg4: memref<32x8xbf16, #tpu.memory_space<vmem>>, %arg5: memref<1x8xf32, #tpu.memory_space<vmem>>, %arg6: memref<1x8xf32, #tpu.memory_space<vmem>>, %arg7: memref<1x1xf32, #tpu.memory_space<vmem>>, %arg8: memref<1x128xf32, #tpu.memory_space<vmem>>) attributes {dimension_semantics = [#tpu.dimension_semantics<parallel>], iteration_bounds = array<i64: 1>, scalar_prefetch = 0 : i64, scratch_operands = 0 : i64, tpu.core_type = #tpu.core_type<tc>, window_params = [{transform_indices = @transform_0, window_bounds = array<i64: 128, 32>}, {transform_indices = @transform_1, window_bounds = array<i64: 128, 32>}, {pipeline_mode = #tpu.pipeline_mode<synchronous>, transform_indices = @transform_2, window_bounds = array<i64: 32, 8>}, {pipeline_mode = #tpu.pipeline_mode<synchronous>, transform_indices = @transform_3, window_bounds = array<i64: 32, 8>}, {pipeline_mode = #tpu.pipeline_mode<synchronous>, transform_indices = @transform_4, window_bounds = array<i64: 1, 8>}, {pipeline_mode = #tpu.pipeline_mode<synchronous>, transform_indices = @transform_5, window_bounds = array<i64: 1, 8>}, {pipeline_mode = #tpu.pipeline_mode<synchronous>, transform_indices = @transform_6, window_bounds = array<i64: 1, 1>}, {transform_indices = @transform_7, window_bounds = array<i64: 1, 128>}]} {
    %c0 = arith.constant 0 : index
    %c0_0 = arith.constant 0 : index
    %0 = vector.load %arg1[%c0, %c0_0] : memref<128x32xbf16, #tpu.memory_space<vmem>>, vector<128x32xbf16>
    %c0_1 = arith.constant 0 : index
    %c0_2 = arith.constant 0 : index
    %1 = vector.load %arg3[%c0_1, %c0_2] : memref<32x8xbf16, #tpu.memory_space<vmem>>, vector<32x8xbf16>
    %cst = arith.constant dense<0.000000e+00> : vector<128x8xf32>
    %2 = tpu.matmul %0, %1, %cst {dimension_numbers = #tpu.dot_dimension_numbers<[1], [0], [0], [1], [0, 0, 1, 1], [], []>} : vector<128x32xbf16>, vector<32x8xbf16>, vector<128x8xf32> -> vector<128x8xf32>
    %c0_3 = arith.constant 0 : index
    %c0_4 = arith.constant 0 : index
    %3 = vector.load %arg2[%c0_3, %c0_4] : memref<128x32xbf16, #tpu.memory_space<vmem>>, vector<128x32xbf16>
    %c0_5 = arith.constant 0 : index
    %c0_6 = arith.constant 0 : index
    %4 = vector.load %arg4[%c0_5, %c0_6] : memref<32x8xbf16, #tpu.memory_space<vmem>>, vector<32x8xbf16>
    %cst_7 = arith.constant dense<0.000000e+00> : vector<128x8xf32>
    %5 = tpu.matmul %3, %4, %cst_7 {dimension_numbers = #tpu.dot_dimension_numbers<[1], [0], [0], [1], [0, 0, 1, 1], [], []>} : vector<128x32xbf16>, vector<32x8xbf16>, vector<128x8xf32> -> vector<128x8xf32>
    %6 = arith.addf %2, %5 : vector<128x8xf32>
    %c0_8 = arith.constant 0 : index
    %c0_9 = arith.constant 0 : index
    %7 = vector.load %arg5[%c0_8, %c0_9] : memref<1x8xf32, #tpu.memory_space<vmem>>, vector<1x8xf32>
    %8 = vector.broadcast %7 : vector<1x8xf32> to vector<128x8xf32>
    %9 = arith.addf %6, %8 : vector<128x8xf32>
    %cst_10 = arith.constant 0.000000e+00 : f32
    %10 = vector.broadcast %cst_10 : f32 to vector<128x8xf32>
    %11 = arith.maximumf %9, %10 : vector<128x8xf32>
    %c0_11 = arith.constant 0 : index
    %c0_12 = arith.constant 0 : index
    %12 = vector.load %arg6[%c0_11, %c0_12] : memref<1x8xf32, #tpu.memory_space<vmem>>, vector<1x8xf32>
    %cst_13 = arith.constant dense<0.000000e+00> : vector<1x128xf32>
    %13 = tpu.matmul %12, %11, %cst_13 {dimension_numbers = #tpu.dot_dimension_numbers<[1], [1], [0], [0], [0, 0, 1, 0], [], []>} : vector<1x8xf32>, vector<128x8xf32>, vector<1x128xf32> -> vector<1x128xf32>
    %c0_14 = arith.constant 0 : index
    %c0_15 = arith.constant 0 : index
    %14 = vector.load %arg7[%c0_14, %c0_15] : memref<1x1xf32, #tpu.memory_space<vmem>>, vector<1x1xf32>
    %15 = vector.broadcast %14 : vector<1x1xf32> to vector<1x128xf32>
    %16 = arith.addf %13, %15 : vector<1x128xf32>
    %cst_16 = arith.constant 0.000000e+00 : f32
    %17 = vector.broadcast %cst_16 : f32 to vector<1x128xf32>
    %18 = arith.subf %17, %16 : vector<1x128xf32>
    %19 = math.exp %18 : vector<1x128xf32>
    %cst_17 = arith.constant 1.000000e+00 : f32
    %20 = vector.broadcast %cst_17 : f32 to vector<1x128xf32>
    %21 = arith.addf %20, %19 : vector<1x128xf32>
    %22 = tpu.reciprocal %21 {approx = true} : vector<1x128xf32> -> vector<1x128xf32>
    %cst_18 = arith.constant 4.000000e+00 : f32
    %23 = vector.broadcast %cst_18 : f32 to vector<1x128xf32>
    %24 = arith.mulf %22, %23 : vector<1x128xf32>
    %cst_19 = arith.constant 1.000000e+00 : f32
    %25 = vector.broadcast %cst_19 : f32 to vector<1x128xf32>
    %26 = arith.addf %24, %25 : vector<1x128xf32>
    %c0_20 = arith.constant 0 : index
    %c0_21 = arith.constant 0 : index
    %27 = vector.load %arg8[%c0_20, %c0_21] : memref<1x128xf32, #tpu.memory_space<vmem>>, vector<1x128xf32>
    tpu.vector_store %arg8[%c0_20, %c0_21], %26 {strides = array<i32>} : memref<1x128xf32, #tpu.memory_space<vmem>>, vector<1x128xf32>,
    return
  }
  func.func @transform_0(%arg0: i32) -> (i32, i32) {
    %c0_i32 = arith.constant 0 : i32
    %c0_i32_0 = arith.constant 0 : i32
    return %arg0, %c0_i32 : i32, i32
  }
  func.func @transform_1(%arg0: i32) -> (i32, i32) {
    %c0_i32 = arith.constant 0 : i32
    %c0_i32_0 = arith.constant 0 : i32
    return %arg0, %c0_i32 : i32, i32
  }
  func.func @transform_2(%arg0: i32) -> (i32, i32) {
    %c0_i32 = arith.constant 0 : i32
    %c0_i32_0 = arith.constant 0 : i32
    %c0_i32_1 = arith.constant 0 : i32
    return %c0_i32, %c0_i32_0 : i32, i32
  }
  func.func @transform_3(%arg0: i32) -> (i32, i32) {
    %c0_i32 = arith.constant 0 : i32
    %c0_i32_0 = arith.constant 0 : i32
    %c0_i32_1 = arith.constant 0 : i32
    return %c0_i32, %c0_i32_0 : i32, i32
  }
  func.func @transform_4(%arg0: i32) -> (i32, i32) {
    %c0_i32 = arith.constant 0 : i32
    %c0_i32_0 = arith.constant 0 : i32
    %c0_i32_1 = arith.constant 0 : i32
    return %c0_i32, %c0_i32_0 : i32, i32
  }
  func.func @transform_5(%arg0: i32) -> (i32, i32) {
    %c0_i32 = arith.constant 0 : i32
    %c0_i32_0 = arith.constant 0 : i32
    %c0_i32_1 = arith.constant 0 : i32
    return %c0_i32, %c0_i32_0 : i32, i32
  }
  func.func @transform_6(%arg0: i32) -> (i32, i32) {
    %c0_i32 = arith.constant 0 : i32
    %c0_i32_0 = arith.constant 0 : i32
    %c0_i32_1 = arith.constant 0 : i32
    return %c0_i32, %c0_i32_0 : i32, i32
  }
  func.func @transform_7(%arg0: i32) -> (i32, i32) {
    %c0_i32 = arith.constant 0 : i32
    %c0_i32_0 = arith.constant 0 : i32
    return %c0_i32, %arg0 : i32, i32
  }
}

</mosaic_0001>

<llo_original>
// kernel: ncf_forward.1
$region0: #{ncf_forward.1}
  #allocation0 [shape = 'u32[]', space=smem, size = 0x4, offset = 0x4, fixed_abs, tag = 'smem constant byte address 0x4 - core index']
  #allocation1 [shape = 'u32[144,128]{1,0:T(1,128)}', space=vmem, size = 0x12000, scoped, tag = 'internal scratch']
  #allocation2 [shape = 'f32[1,1]{1,0:T(1,128)S(1)}', space=vmem, size = 0x200, scoped, tag = 'scoped memory for ncf_forward.1']
  %s0 = inlined_call_operand.vmem [shape: bf16[128,32], index: 0, kind: input, shape index: {}]
  %s1 = inlined_call_operand.vmem [shape: bf16[128,32], index: 1, kind: input, shape index: {}]
  %s2 = inlined_call_operand.vmem [shape: bf16[32,8], index: 2, kind: input, shape index: {}]
  %s3 = inlined_call_operand.vmem [shape: bf16[32,8], index: 3, kind: input, shape index: {}]
  %s4 = inlined_call_operand.vmem [shape: f32[1,8], index: 4, kind: input, shape index: {}]
  %s5 = inlined_call_operand.vmem [shape: f32[1,8], index: 5, kind: input, shape index: {}]
  %s6 = inlined_call_operand.<no memory space> [shape: f32[1,1], index: 6, kind: input, shape index: {}]
  %s7 = inlined_call_operand.vmem [shape: f32[1,128], index: 7, kind: output, shape index: {}]
  %s8 = sld [smem:[#allocation0]]
  $region38: #{ncf_forward.1} parent=0
    _
  %s10 = ssub.s32 1, %s8
  %s11 = scalar_select 0, %s10, %s8
  %v12 = vstv %s6
  %13 = vst [vmem:[#allocation2] sm:$0x1] %v12
  // Predicated region
  $region2: #{ncf_forward.1} parent=0 // pred_check
    _
  $region3: #{ncf_forward.1} parent=0 // pred_check_branch
    %15 = sbr.rel (0) target = $region5
  $region4: #{ncf_forward.1} parent=0 // pred_region
    _
  $region5: #{ncf_forward.1} parent=0 // pred_fallthru
    _
  // Predicated region
  $region6: #{ncf_forward.1} parent=0 // pred_check
    _
  $region7: #{ncf_forward.1} parent=0 // pred_check_branch
    %17 = sbr.rel (0) target = $region9
  $region8: #{ncf_forward.1} parent=0 // pred_region
    _
  $region9: #{ncf_forward.1} parent=0 // pred_fallthru
    _
  // Predicated region
  $region10: #{ncf_forward.1} parent=0 // pred_check
    _
  $region11: #{ncf_forward.1} parent=0 // pred_check_branch
    %19 = sbr.rel (0) target = $region13
  $region12: #{ncf_forward.1} parent=0 // pred_region
    _
  $region13: #{ncf_forward.1} parent=0 // pred_fallthru
    _
  // Predicated region
  $region14: #{ncf_forward.1} parent=0 // pred_check
    _
  $region15: #{ncf_forward.1} parent=0 // pred_check_branch
    %21 = sbr.rel (0) target = $region17
  $region16: #{ncf_forward.1} parent=0 // pred_region
    _
  $region17: #{ncf_forward.1} parent=0 // pred_fallthru
    _
  // Predicated region
  $region18: #{ncf_forward.1} parent=0 // pred_check
    _
  $region19: #{ncf_forward.1} parent=0 // pred_check_branch
    %23 = sbr.rel (0) target = $region21
  $region20: #{ncf_forward.1} parent=0 // pred_region
    _
  $region21: #{ncf_forward.1} parent=0 // pred_fallthru
    _
  // Predicated region
  $region22: #{ncf_forward.1} parent=0 // pred_check
    _
  $region23: #{ncf_forward.1} parent=0 // pred_check_branch
    %25 = sbr.rel (0) target = $region25
  $region24: #{ncf_forward.1} parent=0 // pred_region
    _
  $region25: #{ncf_forward.1} parent=0 // pred_fallthru
    _
  // Predicated region
  $region26: #{ncf_forward.1} parent=0 // pred_check
    _
  $region27: #{ncf_forward.1} parent=0 // pred_check_branch
    %27 = sbr.rel (0) target = $region29
  $region28: #{ncf_forward.1} parent=0 // pred_region
    _
  $region29: #{ncf_forward.1} parent=0 // pred_fallthru
    _
  %v29 = vld [vmem:[%s0] sm:$0xf]
  %v30 = vld [vmem:[%s0 + $0x4] sm:$0xf]
  %v31 = vld [vmem:[%s0 + $0x8] sm:$0xf]
  %v32 = vld [vmem:[%s0 + $0xc] sm:$0xf]
  %v33 = vld [vmem:[%s0 + $0x10] sm:$0xf]
  %v34 = vld [vmem:[%s0 + $0x14] sm:$0xf]
  %v35 = vld [vmem:[%s0 + $0x18] sm:$0xf]
  %v36 = vld [vmem:[%s0 + $0x1c] sm:$0xf]
  %v37 = vld [vmem:[%s0 + $0x20] sm:$0xf]
  %v38 = vld [vmem:[%s0 + $0x24] sm:$0xf]
  %v39 = vld [vmem:[%s0 + $0x28] sm:$0xf]
  %v40 = vld [vmem:[%s0 + $0x2c] sm:$0xf]
  %v41 = vld [vmem:[%s0 + $0x30] sm:$0xf]
  %v42 = vld [vmem:[%s0 + $0x34] sm:$0xf]
  %v43 = vld [vmem:[%s0 + $0x38] sm:$0xf]
  %v44 = vld [vmem:[%s0 + $0x3c] sm:$0xf]
  %v45 = vld [vmem:[%s2] sm:$0xf]
  %v46 = vld [vmem:[%s2 + $0x4] sm:$0xf]
  %v47 = vld [vmem:[%s2 + $0x8] sm:$0xf]
  %v48 = vld [vmem:[%s2 + $0xc] sm:$0xf]
  %v49 = vld [vmem:[%s1] sm:$0xf]
  %v50 = vld [vmem:[%s1 + $0x4] sm:$0xf]
  %v51 = vld [vmem:[%s1 + $0x8] sm:$0xf]
  %v52 = vld [vmem:[%s1 + $0xc] sm:$0xf]
  %v53 = vld [vmem:[%s1 + $0x10] sm:$0xf]
  %v54 = vld [vmem:[%s1 + $0x14] sm:$0xf]
  %v55 = vld [vmem:[%s1 + $0x18] sm:$0xf]
  %v56 = vld [vmem:[%s1 + $0x1c] sm:$0xf]
  %v57 = vld [vmem:[%s1 + $0x20] sm:$0xf]
  %v58 = vld [vmem:[%s1 + $0x24] sm:$0xf]
  %v59 = vld [vmem:[%s1 + $0x28] sm:$0xf]
  %v60 = vld [vmem:[%s1 + $0x2c] sm:$0xf]
  %v61 = vld [vmem:[%s1 + $0x30] sm:$0xf]
  %v62 = vld [vmem:[%s1 + $0x34] sm:$0xf]
  %v63 = vld [vmem:[%s1 + $0x38] sm:$0xf]
  %v64 = vld [vmem:[%s1 + $0x3c] sm:$0xf]
  %v65 = vld [vmem:[%s3] sm:$0xf]
  %v66 = vld [vmem:[%s3 + $0x4] sm:$0xf]
  %v67 = vld [vmem:[%s3 + $0x8] sm:$0xf]
  %v68 = vld [vmem:[%s3 + $0xc] sm:$0xf]
  %v85 = vunpack.c.l.b16 %v49
  %v86 = vunpack.c.l.b16 %v50
  %v87 = vunpack.c.l.b16 %v51
  %v88 = vunpack.c.l.b16 %v52
  %v89 = vunpack.c.l.b16 %v53
  %v90 = vunpack.c.l.b16 %v54
  %v91 = vunpack.c.l.b16 %v55
  %v92 = vunpack.c.l.b16 %v56
  %v93 = vunpack.c.l.b16 %v57
  %v94 = vunpack.c.l.b16 %v58
  %v95 = vunpack.c.l.b16 %v59
  %v96 = vunpack.c.l.b16 %v60
  %v97 = vunpack.c.l.b16 %v61
  %v98 = vunpack.c.l.b16 %v62
  %v99 = vunpack.c.l.b16 %v63
  %v100 = vunpack.c.l.b16 %v64
  %v101 = vpack.c.b16 %v86, %v85
  %v102 = vpack.c.b16 %v88, %v87
  %v103 = vpack.c.b16 %v90, %v89
  %v104 = vpack.c.b16 %v92, %v91
  %v105 = vpack.c.b16 %v94, %v93
  %v106 = vpack.c.b16 %v96, %v95
  %v107 = vpack.c.b16 %v98, %v97
  %v108 = vpack.c.b16 %v100, %v99
  %v113 = vunpack.c.l.b16 %v65
  %v114 = vunpack.c.l.b16 %v66
  %v115 = vunpack.c.l.b16 %v67
  %v116 = vunpack.c.l.b16 %v68
  %v117 = vpack.c.b16 %v114, %v113
  %v118 = vpack.c.b16 %v116, %v115
  %vm121 = vcmask 261120
  %v123 = vsel %vm121, %v101, 0
  %v126 = vsel %vm121, %v102, 0
  %v129 = vsel %vm121, %v103, 0
  %v132 = vsel %vm121, %v104, 0
  %v135 = vsel %vm121, %v105, 0
  %v138 = vsel %vm121, %v106, 0
  %v141 = vsel %vm121, %v107, 0
  %v144 = vsel %vm121, %v108, 0
  %146 = vmatprep.subr.bf16.mxu0 0
  %147 = vmatpush1.bf16.msra.mxu0 0
  %148 = vmatprep.subr.bf16.mxu0 0
  %149 = vmatpush1.bf16.msra.mxu0 0
  %150 = vmatprep.subr.bf16.mxu0 0
  %151 = vmatpush1.bf16.msra.mxu0 0
  %152 = vmatprep.subr.bf16.mxu0 0
  %153 = vmatpush1.bf16.msra.mxu0 0
  %154 = vmatprep.subr.bf16.mxu0 0
  %155 = vmatpush1.bf16.msra.mxu0 0
  %156 = vmatprep.subr.bf16.mxu0 0
  %157 = vmatpush1.bf16.msra.mxu0 0
  %158 = vmatprep.subr.bf16.mxu0 0
  %159 = vmatpush1.bf16.msra.mxu0 %v118
  %160 = vmatprep.subr.bf16.mxu0 0
  %161 = vmatpush1.bf16.msra.mxu0 %v117
  %162 = vmatprep.subr.bf16.mxu0 0
  %163 = vmatpush2.bf16.msra.mxu0 0
  %164 = vmatprep.subr.bf16.mxu0 0
  %165 = vmatpush2.bf16.msra.mxu0 0
  %166 = vmatprep.subr.bf16.mxu0 0
  %167 = vmatpush2.bf16.msra.mxu0 0
  %168 = vmatprep.subr.bf16.mxu0 0
  %169 = vmatpush2.bf16.msra.mxu0 0
  %170 = vmatprep.subr.bf16.mxu0 0
  %171 = vmatpush2.bf16.msra.mxu0 0
  %172 = vmatprep.subr.bf16.mxu0 0
  %173 = vmatpush2.bf16.msra.mxu0 0
  %174 = vmatprep.subr.bf16.mxu0 0
  %175 = vmatpush2.bf16.msra.mxu0 0
  %176 = vmatprep.subr.bf16.mxu0 0
  %177 = vmatpush2.bf16.msra.mxu0 0
  %178 = vmatprep.mubr.bf16.mxu0 0
  %179 = vmatmul.mubr.bf16.gmra.mxu0 %v123
  %v180 = vpop.f32.mrf.mxu0
  %v181 = vadd.f32 0.0, %v180
  %v182 = vpop.f32.mrf.mxu0
  %v183 = vpop.f32.mrf.mxu0
  %v184 = vadd.f32 0.0, %v183
  %v185 = vpop.f32.mrf.mxu0
  %186 = vmatprep.mubr.bf16.mxu0 0
  %187 = vmatmul.mubr.bf16.gmra.mxu0 %v126
  %v188 = vpop.f32.mrf.mxu0
  %v189 = vadd.f32 0.0, %v188
  %v190 = vpop.f32.mrf.mxu0
  %v191 = vpop.f32.mrf.mxu0
  %v192 = vadd.f32 0.0, %v191
  %v193 = vpop.f32.mrf.mxu0
  %194 = vmatprep.mubr.bf16.mxu0 0
  %195 = vmatmul.mubr.bf16.gmra.mxu0 %v129
  %v196 = vpop.f32.mrf.mxu0
  %v197 = vadd.f32 0.0, %v196
  %v198 = vpop.f32.mrf.mxu0
  %v199 = vpop.f32.mrf.mxu0
  %v200 = vadd.f32 0.0, %v199
  %v201 = vpop.f32.mrf.mxu0
  %202 = vmatprep.mubr.bf16.mxu0 0
  %203 = vmatmul.mubr.bf16.gmra.mxu0 %v132
  %v204 = vpop.f32.mrf.mxu0
  %v205 = vadd.f32 0.0, %v204
  %v206 = vpop.f32.mrf.mxu0
  %v207 = vpop.f32.mrf.mxu0
  %v208 = vadd.f32 0.0, %v207
  %v209 = vpop.f32.mrf.mxu0
  %210 = vmatprep.mubr.bf16.mxu0 0
  %211 = vmatmul.mubr.bf16.gmra.mxu0 %v135
  %v212 = vpop.f32.mrf.mxu0
  %v213 = vadd.f32 0.0, %v212
  %v214 = vpop.f32.mrf.mxu0
  %v215 = vpop.f32.mrf.mxu0
  %v216 = vadd.f32 0.0, %v215
  %v217 = vpop.f32.mrf.mxu0
  %218 = vmatprep.mubr.bf16.mxu0 0
  %219 = vmatmul.mubr.bf16.gmra.mxu0 %v138
  %v220 = vpop.f32.mrf.mxu0
  %v221 = vadd.f32 0.0, %v220
  %v222 = vpop.f32.mrf.mxu0
  %v223 = vpop.f32.mrf.mxu0
  %v224 = vadd.f32 0.0, %v223
  %v225 = vpop.f32.mrf.mxu0
  %226 = vmatprep.mubr.bf16.mxu0 0
  %227 = vmatmul.mubr.bf16.gmra.mxu0 %v141
  %v228 = vpop.f32.mrf.mxu0
  %v229 = vadd.f32 0.0, %v228
  %v230 = vpop.f32.mrf.mxu0
  %v231 = vpop.f32.mrf.mxu0
  %v232 = vadd.f32 0.0, %v231
  %v233 = vpop.f32.mrf.mxu0
  %234 = vmatprep.mubr.bf16.mxu0 0
  %235 = vmatmul.mubr.bf16.gmra.mxu0 %v144
  %v236 = vpop.f32.mrf.mxu0
  %v237 = vadd.f32 0.0, %v236
  %v238 = vpop.f32.mrf.mxu0
  %v239 = vpop.f32.mrf.mxu0
  %v240 = vadd.f32 0.0, %v239
  %v241 = vpop.f32.mrf.mxu0
  %242 = vdwg.mxu0
  %v259 = vunpack.c.l.b16 %v29
  %v260 = vunpack.c.l.b16 %v30
  %v261 = vunpack.c.l.b16 %v31
  %v262 = vunpack.c.l.b16 %v32
  %v263 = vunpack.c.l.b16 %v33
  %v264 = vunpack.c.l.b16 %v34
  %v265 = vunpack.c.l.b16 %v35
  %v266 = vunpack.c.l.b16 %v36
  %v267 = vunpack.c.l.b16 %v37
  %v268 = vunpack.c.l.b16 %v38
  %v269 = vunpack.c.l.b16 %v39
  %v270 = vunpack.c.l.b16 %v40
  %v271 = vunpack.c.l.b16 %v41
  %v272 = vunpack.c.l.b16 %v42
  %v273 = vunpack.c.l.b16 %v43
  %v274 = vunpack.c.l.b16 %v44
  %v275 = vpack.c.b16 %v260, %v259
  %v276 = vpack.c.b16 %v262, %v261
  %v277 = vpack.c.b16 %v264, %v263
  %v278 = vpack.c.b16 %v266, %v265
  %v279 = vpack.c.b16 %v268, %v267
  %v280 = vpack.c.b16 %v270, %v269
  %v281 = vpack.c.b16 %v272, %v271
  %v282 = vpack.c.b16 %v274, %v273
  %v287 = vunpack.c.l.b16 %v45
  %v288 = vunpack.c.l.b16 %v46
  %v289 = vunpack.c.l.b16 %v47
  %v290 = vunpack.c.l.b16 %v48
  %v291 = vpack.c.b16 %v288, %v287
  %v292 = vpack.c.b16 %v290, %v289
  %v296 = vsel %vm121, %v275, 0
  %v299 = vsel %vm121, %v276, 0
  %v302 = vsel %vm121, %v277, 0
  %v305 = vsel %vm121, %v278, 0
  %v308 = vsel %vm121, %v279, 0
  %v311 = vsel %vm121, %v280, 0
  %v314 = vsel %vm121, %v281, 0
  %v317 = vsel %vm121, %v282, 0
  %319 = vmatprep.subr.bf16.mxu0 0
  %320 = vmatpush1.bf16.msra.mxu0 0
  %321 = vmatprep.subr.bf16.mxu0 0
  %322 = vmatpush1.bf16.msra.mxu0 0
  %323 = vmatprep.subr.bf16.mxu0 0
  %324 = vmatpush1.bf16.msra.mxu0 0
  %325 = vmatprep.subr.bf16.mxu0 0
  %326 = vmatpush1.bf16.msra.mxu0 0
  %327 = vmatprep.subr.bf16.mxu0 0
  %328 = vmatpush1.bf16.msra.mxu0 0
  %329 = vmatprep.subr.bf16.mxu0 0
  %330 = vmatpush1.bf16.msra.mxu0 0
  %331 = vmatprep.subr.bf16.mxu0 0
  %332 = vmatpush1.bf16.msra.mxu0 %v292
  %333 = vmatprep.subr.bf16.mxu0 0
  %334 = vmatpush1.bf16.msra.mxu0 %v291
  %335 = vmatprep.subr.bf16.mxu0 0
  %336 = vmatpush2.bf16.msra.mxu0 0
  %337 = vmatprep.subr.bf16.mxu0 0
  %338 = vmatpush2.bf16.msra.mxu0 0
  %339 = vmatprep.subr.bf16.mxu0 0
  %340 = vmatpush2.bf16.msra.mxu0 0
  %341 = vmatprep.subr.bf16.mxu0 0
  %342 = vmatpush2.bf16.msra.mxu0 0
  %343 = vmatprep.subr.bf16.mxu0 0
  %344 = vmatpush2.bf16.msra.mxu0 0
  %345 = vmatprep.subr.bf16.mxu0 0
  %346 = vmatpush2.bf16.msra.mxu0 0
  %347 = vmatprep.subr.bf16.mxu0 0
  %348 = vmatpush2.bf16.msra.mxu0 0
  %349 = vmatprep.subr.bf16.mxu0 0
  %350 = vmatpush2.bf16.msra.mxu0 0
  %351 = vmatprep.mubr.bf16.mxu0 0
  %352 = vmatmul.mubr.bf16.gmra.mxu0 %v296
  %v353 = vpop.f32.mrf.mxu0
  %v354 = vadd.f32 %v181, %v353
  %v355 = vpop.f32.mrf.mxu0
  %v356 = vpop.f32.mrf.mxu0
  %v357 = vadd.f32 %v184, %v356
  %v358 = vpop.f32.mrf.mxu0
  %359 = vmatprep.mubr.bf16.mxu0 0
  %360 = vmatmul.mubr.bf16.gmra.mxu0 %v299
  %v361 = vpop.f32.mrf.mxu0
  %v362 = vadd.f32 %v189, %v361
  %v363 = vpop.f32.mrf.mxu0
  %v364 = vpop.f32.mrf.mxu0
  %v365 = vadd.f32 %v192, %v364
  %v366 = vpop.f32.mrf.mxu0
  %367 = vmatprep.mubr.bf16.mxu0 0
  %368 = vmatmul.mubr.bf16.gmra.mxu0 %v302
  %v369 = vpop.f32.mrf.mxu0
  %v370 = vadd.f32 %v197, %v369
  %v371 = vpop.f32.mrf.mxu0
  %v372 = vpop.f32.mrf.mxu0
  %v373 = vadd.f32 %v200, %v372
  %v374 = vpop.f32.mrf.mxu0
  %375 = vmatprep.mubr.bf16.mxu0 0
  %376 = vmatmul.mubr.bf16.gmra.mxu0 %v305
  %v377 = vpop.f32.mrf.mxu0
  %v378 = vadd.f32 %v205, %v377
  %v379 = vpop.f32.mrf.mxu0
  %v380 = vpop.f32.mrf.mxu0
  %v381 = vadd.f32 %v208, %v380
  %v382 = vpop.f32.mrf.mxu0
  %383 = vmatprep.mubr.bf16.mxu0 0
  %384 = vmatmul.mubr.bf16.gmra.mxu0 %v308
  %v385 = vpop.f32.mrf.mxu0
  %v386 = vadd.f32 %v213, %v385
  %v387 = vpop.f32.mrf.mxu0
  %v388 = vpop.f32.mrf.mxu0
  %v389 = vadd.f32 %v216, %v388
  %v390 = vpop.f32.mrf.mxu0
  %391 = vmatprep.mubr.bf16.mxu0 0
  %392 = vmatmul.mubr.bf16.gmra.mxu0 %v311
  %v393 = vpop.f32.mrf.mxu0
  %v394 = vadd.f32 %v221, %v393
  %v395 = vpop.f32.mrf.mxu0
  %v396 = vpop.f32.mrf.mxu0
  %v397 = vadd.f32 %v224, %v396
  %v398 = vpop.f32.mrf.mxu0
  %399 = vmatprep.mubr.bf16.mxu0 0
  %400 = vmatmul.mubr.bf16.gmra.mxu0 %v314
  %v401 = vpop.f32.mrf.mxu0
  %v402 = vadd.f32 %v229, %v401
  %v403 = vpop.f32.mrf.mxu0
  %v404 = vpop.f32.mrf.mxu0
  %v405 = vadd.f32 %v232, %v404
  %v406 = vpop.f32.mrf.mxu0
  %407 = vmatprep.mubr.bf16.mxu0 0
  %408 = vmatmul.mubr.bf16.gmra.mxu0 %v317
  %v409 = vpop.f32.mrf.mxu0
  %v410 = vadd.f32 %v237, %v409
  %v411 = vpop.f32.mrf.mxu0
  %v412 = vpop.f32.mrf.mxu0
  %v413 = vadd.f32 %v240, %v412
  %v414 = vpop.f32.mrf.mxu0
  %415 = vdwg.mxu0
  %v416 = vld [vmem:[%s4] sm:$0x1]
  %v418 = vlaneseq
  %v419 = vshrl.u32 %v418, 7
  %v420 = vsub.s32 0, %v419
  %v421 = vrot.slane %v416, %v420
  %v423 = vadd.f32 %v354, %v421
  %v424 = vadd.f32 %v357, %v421
  %v425 = vadd.f32 %v362, %v421
  %v426 = vadd.f32 %v365, %v421
  %v427 = vadd.f32 %v370, %v421
  %v428 = vadd.f32 %v373, %v421
  %v429 = vadd.f32 %v378, %v421
  %v430 = vadd.f32 %v381, %v421
  %v431 = vadd.f32 %v386, %v421
  %v432 = vadd.f32 %v389, %v421
  %v433 = vadd.f32 %v394, %v421
  %v434 = vadd.f32 %v397, %v421
  %v435 = vadd.f32 %v402, %v421
  %v436 = vadd.f32 %v405, %v421
  %v437 = vadd.f32 %v410, %v421
  %v438 = vadd.f32 %v413, %v421
  %v439 = vmax.f32 %v423, 0.0
  %v440 = vmax.f32 %v424, 0.0
  %v441 = vmax.f32 %v425, 0.0
  %v442 = vmax.f32 %v426, 0.0
  %v443 = vmax.f32 %v427, 0.0
  %v444 = vmax.f32 %v428, 0.0
  %v445 = vmax.f32 %v429, 0.0
  %v446 = vmax.f32 %v430, 0.0
  %v447 = vmax.f32 %v431, 0.0
  %v448 = vmax.f32 %v432, 0.0
  %v449 = vmax.f32 %v433, 0.0
  %v450 = vmax.f32 %v434, 0.0
  %v451 = vmax.f32 %v435, 0.0
  %v452 = vmax.f32 %v436, 0.0
  %v453 = vmax.f32 %v437, 0.0
  %v454 = vmax.f32 %v438, 0.0
  %v455 = vld [vmem:[%s5] sm:$0x1]
  %v456 = vld [vmem:[#allocation2] sm:$0x1]
  %458 = vset.pattern.permute.xlu0 0
  %459 = vperm.xlu0 %458, %v456
  %v460 = vpop.permute.xlu0 %459
  %v462 = vlaneseq
  %v463 = vshrl.u32 %v462, 7
  %v464 = vsub.s32 0, %v463
  %v465 = vrot.slane %v460, %v464
  %vm466 = vcmask 64512
  %v468 = vsel %vm466, %v455, 0
  %v471 = vsel %vm466, %v439, 0
  %v474 = vsel %vm466, %v440, 0
  %v477 = vsel %vm466, %v441, 0
  %v480 = vsel %vm466, %v442, 0
  %v483 = vsel %vm466, %v443, 0
  %v486 = vsel %vm466, %v444, 0
  %v489 = vsel %vm466, %v445, 0
  %v492 = vsel %vm466, %v446, 0
  %v495 = vsel %vm466, %v447, 0
  %v498 = vsel %vm466, %v448, 0
  %v501 = vsel %vm466, %v449, 0
  %v504 = vsel %vm466, %v450, 0
  %v507 = vsel %vm466, %v451, 0
  %v510 = vsel %vm466, %v452, 0
  %v513 = vsel %vm466, %v453, 0
  %v516 = vsel %vm466, %v454, 0
  %518 = vmatprep.subr.mxu0 0.0
  %519 = vmatpush1.xpose.msra.mxu0 %v516
  %520 = vmatprep.subr.mxu0 0.0
  %521 = vmatpush1.xpose.msra.mxu0 %v513
  %522 = vmatprep.subr.mxu0 0.0
  %523 = vmatpush1.xpose.msra.mxu0 %v510
  %524 = vmatprep.subr.mxu0 0.0
  %525 = vmatpush1.xpose.msra.mxu0 %v507
  %526 = vmatprep.subr.mxu0 0.0
  %527 = vmatpush1.xpose.msra.mxu0 %v504
  %528 = vmatprep.subr.mxu0 0.0
  %529 = vmatpush1.xpose.msra.mxu0 %v501
  %530 = vmatprep.subr.mxu0 0.0
  %531 = vmatpush1.xpose.msra.mxu0 %v498
  %532 = vmatprep.subr.mxu0 0.0
  %533 = vmatpush1.xpose.msra.mxu0 %v495
  %534 = vmatprep.subr.mxu0 0.0
  %535 = vmatpush1.xpose.msra.mxu0 %v492
  %536 = vmatprep.subr.mxu0 0.0
  %537 = vmatpush1.xpose.msra.mxu0 %v489
  %538 = vmatprep.subr.mxu0 0.0
  %539 = vmatpush1.xpose.msra.mxu0 %v486
  %540 = vmatprep.subr.mxu0 0.0
  %541 = vmatpush1.xpose.msra.mxu0 %v483
  %542 = vmatprep.subr.mxu0 0.0
  %543 = vmatpush1.xpose.msra.mxu0 %v480
  %544 = vmatprep.subr.mxu0 0.0
  %545 = vmatpush1.xpose.msra.mxu0 %v477
  %546 = vmatprep.subr.mxu0 0.0
  %547 = vmatpush1.xpose.msra.mxu0 %v474
  %548 = vmatprep.subr.mxu0 0.0
  %549 = vmatpush1.xpose.msra.mxu0 %v471
  %550 = vmatprep.subr.mxu0 0.0
  %551 = vmatpush2.xpose.msra.mxu0 0.0
  %552 = vmatprep.subr.mxu0 0.0
  %553 = vmatpush2.xpose.msra.mxu0 0.0
  %554 = vmatprep.subr.mxu0 0.0
  %555 = vmatpush2.xpose.msra.mxu0 0.0
  %556 = vmatprep.subr.mxu0 0.0
  %557 = vmatpush2.xpose.msra.mxu0 0.0
  %558 = vmatprep.subr.mxu0 0.0
  %559 = vmatpush2.xpose.msra.mxu0 0.0
  %560 = vmatprep.subr.mxu0 0.0
  %561 = vmatpush2.xpose.msra.mxu0 0.0
  %562 = vmatprep.subr.mxu0 0.0
  %563 = vmatpush2.xpose.msra.mxu0 0.0
  %564 = vmatprep.subr.mxu0 0.0
  %565 = vmatpush2.xpose.msra.mxu0 0.0
  %566 = vmatprep.subr.mxu0 0.0
  %567 = vmatpush2.xpose.msra.mxu0 0.0
  %568 = vmatprep.subr.mxu0 0.0
  %569 = vmatpush2.xpose.msra.mxu0 0.0
  %570 = vmatprep.subr.mxu0 0.0
  %571 = vmatpush2.xpose.msra.mxu0 0.0
  %572 = vmatprep.subr.mxu0 0.0
  %573 = vmatpush2.xpose.msra.mxu0 0.0
  %574 = vmatprep.subr.mxu0 0.0
  %575 = vmatpush2.xpose.msra.mxu0 0.0
  %576 = vmatprep.subr.mxu0 0.0
  %577 = vmatpush2.xpose.msra.mxu0 0.0
  %578 = vmatprep.subr.mxu0 0.0
  %579 = vmatpush2.xpose.msra.mxu0 0.0
  %580 = vmatprep.subr.mxu0 0.0
  %581 = vmatpush2.xpose.msra.mxu0 0.0
  %582 = vmatprep.mubr.f32.mxu0 0.0
  %583 = vmatmul.mubr.f32.gmra.mxu0 %v468
  %v584 = vpop.f32.mrf.mxu0
  %v585 = vadd.f32 %v465, %v584
  %v586 = vpop.f32.mrf.mxu0
  %587 = vdwg.mxu0
  %v588 = vsub.f32 0.0, %v585
  %v589 = vmul.f32 %v588, 1.442695
  %v590 = vpow.pop %v589
  %v591 = vadd.f32 %v590, 1.0
  %v592 = vrcp.pop %v591
  %v593 = vmul.f32 %v592, 4.0
  %v594 = vadd.f32 %v593, 1.0
  %595 = vst [vmem:[%s7] sm:$0x1] %v594
  // Predicated region
  $region30: #{ncf_forward.1} parent=0 // pred_check
    _
  $region31: #{ncf_forward.1} parent=0 // pred_check_branch
    %597 = sbr.rel (0) target = $region33
  $region32: #{ncf_forward.1} parent=0 // pred_region
    _
  $region33: #{ncf_forward.1} parent=0 // pred_fallthru
    _
  // Predicated region
  $region34: #{ncf_forward.1} parent=0 // pred_check
    _
  $region35: #{ncf_forward.1} parent=0 // pred_check_branch
    %599 = sbr.rel (0) target = $region37
  $region36: #{ncf_forward.1} parent=0 // pred_region
    _
  $region37: #{ncf_forward.1} parent=0 // pred_fallthru
    _

</llo_original>
